<compile_context>
chip_gen: v6e
topology: v6e:2x2x1
jax: 0.10.0
libtpu: 0.0.40
codegen_flags: <defaults>
</compile_context>

<pallas_src>
import functools

import jax
import jax.numpy as jnp
import numpy as np
from jax.experimental import pallas as pl
from jax.experimental.pallas import tpu as pltpu

WIN = 5  # cat_embedding concatenates 5 consecutive (zero-padded) word embeddings


def _round_up(x, m):
    return (x + m - 1) // m * m


def _vmem_limit_bytes():
    # Generation-aware scoped-VMEM budget: ~3/4 of physical VMEM per core
    # (v5e/v6e: 128 MiB -> 96 MiB; v7x: 64 MiB -> 48 MiB); conservative fallback.
    try:
        cap = int(pltpu.get_tpu_info().vmem_capacity_bytes)
    except Exception:
        cap = 64 * 1024 * 1024
    return max(32 * 1024 * 1024, min((cap * 3) // 4, 96 * 1024 * 1024))


def pnc_kernel(x_ref, w_ref, b_ref, o_ref, *, tt, C):
    # x_ref: (1, Tp+8, D) bf16  whole zero-padded sequence for batch b (resident per b)
    # w_ref: (D, WIN*C)   bf16  five K=D weight slabs concatenated along lanes
    # b_ref: (1, C)       f32   linear bias
    # o_ref: (1, tt, C)   f32   logits for rows [i*tt, i*tt + tt)
    i = pl.program_id(1)
    t0 = pl.multiple_of(i * tt, 8)
    xw = x_ref[0, pl.ds(t0, tt + 8), :]                                   # (tt+8, D) bf16
    y = jnp.dot(xw, w_ref[...], preferred_element_type=jnp.float32)      # (tt+8, 5C) f32
    acc = b_ref[...]                                                      # (1, C) -> broadcast
    for s in range(WIN):
        acc = acc + y[s:s + tt, s * C:(s + 1) * C]                        # shifted adds (on-chip)
    o_ref[0] = acc


def pnc_forward(x, w_t, b, *, t_tile=1024):
    """x: (B,T,D) f32, w_t: (WIN*D, C) f32 (= linear.weight.T), b: (1,C) f32 -> (B,T,C) f32."""
    B, T, D = x.shape
    C = w_t.shape[1]

    # T-tile selection: single tile if the sequence is short, else a multiple of 16
    # (bf16 sublane-pair aligned dynamic-slice starts).
    t_full = _round_up(T, 8)
    tt_req = max(16, _round_up(t_tile, 16))
    tt = t_full if t_full <= tt_req else tt_req
    Tp = _round_up(T, tt)

    # bf16 BEFORE the pad; 2 leading zero rows (window halo) plus (Tp - T + 6)
    # trailing zero rows so every tile slices an aligned (tt + 8, D) window.
    xp = jnp.pad(x.astype(jnp.bfloat16), ((0, 0), (2, Tp - T + 6), (0, 0)))  # (B, Tp+8, D)

    # Fold the five K=D weight slabs: w2[d, s*C + c] = w_t[s*D + d, c].
    w2 = jnp.transpose(w_t.reshape(WIN, D, C), (1, 0, 2)).reshape(D, WIN * C)
    w2 = w2.astype(jnp.bfloat16)
    b32 = b.reshape(1, C).astype(jnp.float32)

    grid = (B, Tp // tt)

    cost = pl.CostEstimate(
        flops=2 * grid[0] * grid[1] * (tt + 8) * D * (WIN * C),
        transcendentals=0,
        bytes_accessed=int(
            B * (Tp + 8) * D * 2        # x read once per sequence (bf16)
            + D * WIN * C * 2           # folded weight
            + C * 4                     # bias
            + B * Tp * C * 4            # un-padded f32 logits
        ),
    )

    kernel = functools.partial(pnc_kernel, tt=tt, C=C)

    out = pl.pallas_call(
        kernel,
        out_shape=jax.ShapeDtypeStruct((B, Tp, C), jnp.float32),
        grid_spec=pltpu.PrefetchScalarGridSpec(
            num_scalar_prefetch=0,
            grid=grid,
            in_specs=[
                # whole padded sequence for batch b, constant across the T-tile axis
                pl.BlockSpec((1, Tp + 8, D), lambda bi, ti: (bi, 0, 0)),
                pl.BlockSpec((D, WIN * C), lambda bi, ti: (0, 0)),
                pl.BlockSpec((1, C), lambda bi, ti: (0, 0)),
            ],
            out_specs=pl.BlockSpec((1, tt, C), lambda bi, ti: (bi, ti, 0)),
        ),
        compiler_params=pltpu.CompilerParams(
            dimension_semantics=("parallel", "parallel"),
            vmem_limit_bytes=_vmem_limit_bytes(),
        ),
        cost_estimate=cost,
    )(xp, w2, b32)

    if Tp != T:
        out = out[:, :T, :]   # drop padded T rows only (tiny copy; no C re-pack)
    return out


def reference_f32(x, w_t, b):
    """Plain-JAX f32 reference of the same forward math."""
    B, T, D = x.shape
    xp = jnp.pad(x, ((0, 0), (2, 2), (0, 0)))
    cat = jnp.concatenate([xp[:, k:k + T, :] for k in range(WIN)], axis=-1)
    return jnp.einsum("btk,kc->btc", cat, w_t) + b.reshape(-1)


def reference_bf16(x, w_t, b):
    """Reference with the same bf16 input casts the kernel uses (f32 accumulate)."""
    B, T, D = x.shape
    xb = x.astype(jnp.bfloat16).astype(jnp.float32)
    xp = jnp.pad(xb, ((0, 0), (2, 2), (0, 0)))
    cat = jnp.concatenate([xp[:, k:k + T, :] for k in range(WIN)], axis=-1)
    w32 = w_t.astype(jnp.bfloat16).astype(jnp.float32)
    return jnp.einsum("btk,kc->btc", cat, w32) + b.reshape(-1)


if __name__ == "__main__":
    B, T, D, C = 2, 8, 32, 4   # small synthetic: batch=2, seq=8, embed_dim=32, class_num=4

    key = jax.random.PRNGKey(0)
    k_x, k_w, k_b = jax.random.split(key, 3)

    # Deterministic "embedding features" (stands in for handle_embedding_input output).
    x = jax.random.normal(k_x, (B, T, D), dtype=jnp.float32)

    # Linear params: xavier_uniform on weight (out=C, in=WIN*D), bias ~ U(±sqrt(6/(D+1))).
    lim_w = float(np.sqrt(6.0 / (WIN * D + C)))
    w = jax.random.uniform(k_w, (C, WIN * D), jnp.float32, -lim_w, lim_w)
    lim_b = float(np.sqrt(6.0 / (D + 1)))
    b = jax.random.uniform(k_b, (1, C), jnp.float32, -lim_b, lim_b)
    w_t = jnp.asarray(w).T  # (WIN*D, C)

    out = pnc_forward(x, w_t, b)
    out = jax.block_until_ready(out)
    assert out.shape == (B, T, C)

    # Tight check against a reference using the same bf16 input casts.
    ref_b = reference_bf16(x, w_t, b)
    assert np.allclose(np.asarray(out), np.asarray(ref_b), rtol=1e-3, atol=1e-3)

    # Looser semantic check against the full-f32 reference (bf16 quantization noise).
    ref_f = reference_f32(x, w_t, b)
    assert np.allclose(np.asarray(out), np.asarray(ref_f), rtol=5e-2, atol=5e-2)

    print("KERNEL_OK")
</pallas_src>

<mosaic_0001>
module attributes {stable_mosaic.version = 11 : i64} {
  func.func @pnc_kernel(%arg0: i32, %arg1: i32, %arg2: memref<1x16x32xbf16, #tpu.memory_space<vmem>>, %arg3: memref<32x20xbf16, #tpu.memory_space<vmem>>, %arg4: memref<1x4xf32, #tpu.memory_space<vmem>>, %arg5: memref<1x8x4xf32, #tpu.memory_space<vmem>>) attributes {dimension_semantics = [#tpu.dimension_semantics<parallel>, #tpu.dimension_semantics<parallel>], iteration_bounds = array<i64: 2, 1>, scalar_prefetch = 0 : i64, scratch_operands = 0 : i64, tpu.core_type = #tpu.core_type<tc>, window_params = [{transform_indices = @transform_0, window_bounds = array<i64: 1, 16, 32>}, {pipeline_mode = #tpu.pipeline_mode<synchronous>, transform_indices = @transform_1, window_bounds = array<i64: 32, 20>}, {pipeline_mode = #tpu.pipeline_mode<synchronous>, transform_indices = @transform_2, window_bounds = array<i64: 1, 4>}, {transform_indices = @transform_3, window_bounds = array<i64: 1, 8, 4>}]} {
    %c8_i32 = arith.constant 8 : i32
    %0 = arith.muli %arg1, %c8_i32 : i32
    %1 = tpu.assume_multiple %0, 8 : i32
    %c0 = arith.constant 0 : index
    %2 = arith.index_cast %1 : i32 to index
    %c0_0 = arith.constant 0 : index
    %3 = vector.load %arg2[%c0, %2, %c0_0] : memref<1x16x32xbf16, #tpu.memory_space<vmem>>, vector<1x16x32xbf16>
    %4 = vector.shape_cast %3 : vector<1x16x32xbf16> to vector<16x32xbf16>
    %c0_1 = arith.constant 0 : index
    %c0_2 = arith.constant 0 : index
    %5 = vector.load %arg3[%c0_1, %c0_2] : memref<32x20xbf16, #tpu.memory_space<vmem>>, vector<32x20xbf16>
    %cst = arith.constant dense<0.000000e+00> : vector<16x20xf32>
    %6 = tpu.matmul %4, %5, %cst {dimension_numbers = #tpu.dot_dimension_numbers<[1], [0], [0], [1], [0, 0, 1, 1], [], []>} : vector<16x32xbf16>, vector<32x20xbf16>, vector<16x20xf32> -> vector<16x20xf32>
    %c0_3 = arith.constant 0 : index
    %c0_4 = arith.constant 0 : index
    %7 = vector.load %arg4[%c0_3, %c0_4] : memref<1x4xf32, #tpu.memory_space<vmem>>, vector<1x4xf32>
    %8 = vector.extract_strided_slice %6 {offsets = [0, 0], sizes = [8, 4], strides = [1, 1]} : vector<16x20xf32> to vector<8x4xf32>
    %9 = vector.broadcast %7 : vector<1x4xf32> to vector<8x4xf32>
    %10 = arith.addf %9, %8 : vector<8x4xf32>
    %11 = vector.extract_strided_slice %6 {offsets = [1, 4], sizes = [8, 4], strides = [1, 1]} : vector<16x20xf32> to vector<8x4xf32>
    %12 = arith.addf %10, %11 : vector<8x4xf32>
    %13 = vector.extract_strided_slice %6 {offsets = [2, 8], sizes = [8, 4], strides = [1, 1]} : vector<16x20xf32> to vector<8x4xf32>
    %14 = arith.addf %12, %13 : vector<8x4xf32>
    %15 = vector.extract_strided_slice %6 {offsets = [3, 12], sizes = [8, 4], strides = [1, 1]} : vector<16x20xf32> to vector<8x4xf32>
    %16 = arith.addf %14, %15 : vector<8x4xf32>
    %17 = vector.extract_strided_slice %6 {offsets = [4, 16], sizes = [8, 4], strides = [1, 1]} : vector<16x20xf32> to vector<8x4xf32>
    %18 = arith.addf %16, %17 : vector<8x4xf32>
    %c0_5 = arith.constant 0 : index
    %c0_6 = arith.constant 0 : index
    %c0_7 = arith.constant 0 : index
    %19 = vector.load %arg5[%c0_5, %c0_6, %c0_7] : memref<1x8x4xf32, #tpu.memory_space<vmem>>, vector<1x8x4xf32>
    %20 = vector.shape_cast %19 : vector<1x8x4xf32> to vector<8x4xf32>
    %21 = vector.shape_cast %18 : vector<8x4xf32> to vector<1x8x4xf32>
    tpu.vector_store %arg5[%c0_5, %c0_6, %c0_7], %21 {strides = array<i32>} : memref<1x8x4xf32, #tpu.memory_space<vmem>>, vector<1x8x4xf32>,
    return
  }
  func.func @transform_0(%arg0: i32, %arg1: i32) -> (i32, i32, i32) {
    %c0_i32 = arith.constant 0 : i32
    %c0_i32_0 = arith.constant 0 : i32
    %c0_i32_1 = arith.constant 0 : i32
    return %arg0, %c0_i32, %c0_i32_0 : i32, i32, i32
  }
  func.func @transform_1(%arg0: i32, %arg1: i32) -> (i32, i32) {
    %c0_i32 = arith.constant 0 : i32
    %c0_i32_0 = arith.constant 0 : i32
    %c0_i32_1 = arith.constant 0 : i32
    return %c0_i32, %c0_i32_0 : i32, i32
  }
  func.func @transform_2(%arg0: i32, %arg1: i32) -> (i32, i32) {
    %c0_i32 = arith.constant 0 : i32
    %c0_i32_0 = arith.constant 0 : i32
    %c0_i32_1 = arith.constant 0 : i32
    return %c0_i32, %c0_i32_0 : i32, i32
  }
  func.func @transform_3(%arg0: i32, %arg1: i32) -> (i32, i32, i32) {
    %c0_i32 = arith.constant 0 : i32
    %c0_i32_0 = arith.constant 0 : i32
    return %arg0, %arg1, %c0_i32 : i32, i32, i32
  }
}

</mosaic_0001>

<llo_original>
// kernel: tpu_custom_call.1
$region0: #{tpu_custom_call.1}
  #allocation0 [shape = 'u32[]', space=smem, size = 0x4, offset = 0x4, fixed_abs, tag = 'smem constant byte address 0x4 - core index']
  #allocation1 [shape = 'u32[144,128]{1,0:T(1,128)}', space=vmem, size = 0x12000, scoped, tag = 'internal scratch']
  %s0 = inlined_call_operand.vmem [shape: bf16[2,16,32], index: 0, kind: input, shape index: {}]
  %s1 = inlined_call_operand.vmem [shape: bf16[32,20], index: 1, kind: input, shape index: {}]
  %s2 = inlined_call_operand.vmem [shape: f32[1,4], index: 2, kind: input, shape index: {}]
  %s3 = inlined_call_operand.vmem [shape: f32[2,8,4], index: 3, kind: output, shape index: {}]
  %s4 = sld [smem:[#allocation0]]
  $region45: #{tpu_custom_call.1} parent=0
    _
  %s6 = ssub.s32 1, %s4
  %s7 = scalar_select 0, %s6, %s4
  loop: start=0, step=1, limit=4
  $region2: #{tpu_custom_call.1} parent=0 // loop_pre_header
    _
  $region3: #{tpu_custom_call.1} parent=0 // loop_header
    %s9 = sphi 0, %s13
    %p10 = scmp.ge.s32.totalorder %s9, 4
    %s16 = sphi 0, %s28
    %s17 = sphi 0, %s24
    %s18 = sphi 0, %s16
    %s19 = sphi 0, %s17
    %s20 = sphi 0, %s18
    %s21 = sphi 0, %s19
    %s31 = sphi 0, %s33
    %s34 = sphi 0, %s31
    %s35 = sphi 0, %s34
    %s51 = sphi 0, %s35
    %s55 = sphi 0, %s55
    %s57 = sphi 0, %s55
    %s58 = sphi 0, %s57
    %s72 = sphi 0, %s58
    %s76 = sphi 0, %s76
    %s78 = sphi 0, %s76
    %s79 = sphi 0, %s78
    %s93 = sphi 0, %s79
    %s101 = sphi 0, %s103
    %s104 = sphi 0, %s101
    %s105 = sphi 0, %s104
    %s121 = sphi 0, %s105
  $region4: #{tpu_custom_call.1} parent=0 // loop_header_branch
    %12 = sbr.rel (%p10) target = $region8
  $region5: #{tpu_custom_call.1} parent=0 // loop_body
    %s14 = ssub.s32 %s9, 1
    %s15 = ssub.s32 %s9, 2
    %s22 = sadd.s32 1, %s17
    %p23 = scmp.ge.s32.totalorder %s22, 1
    %s24 = scalar_select %p23, 0, %s22
    %s25 = sadd.s32 1, %s16
    %s26 = scalar_select %p23, %s25, %s16
    %p27 = scmp.ge.s32.totalorder %s26, 2
    %s28 = scalar_select %p27, 0, %s26
    %s29 = ssub.s32 %s16, %s28
    %p30 = scmp.eq.s32.totalorder %s29, 0
    %s32 = sadd.s32 %s31, 1
    %s33 = scalar_select %p30, %s31, %s32
    %p36 = pneg %p30
    %p37 = scmp.eq.s32.totalorder %s9, 1
    %p38 = por %p36, %p37
    %p39 = scmp.ne.s32.totalorder %s31, %s34
    %p40 = scmp.eq.s32.totalorder %s9, 0
    %p41 = por %p39, %p40
    %p42 = scmp.ne.s32.totalorder %s31, %s34
    %p43 = scmp.eq.s32.totalorder %s14, 1
    %p44 = por %p42, %p43
    %p45 = scmp.ne.s32.totalorder %s34, %s35
    %p46 = scmp.eq.s32.totalorder %s14, 0
    %p47 = por %p45, %p46
    %p48 = scmp.ne.s32.totalorder %s34, %s35
    %p49 = scmp.eq.s32.totalorder %s15, 1
    %p50 = por %p48, %p49
    %p52 = scmp.ne.s32.totalorder %s35, %s51
    %p53 = scmp.eq.s32.totalorder %s15, 0
    %p54 = por %p52, %p53
    %s56 = sadd.s32 %s55, 1
    %p59 = scmp.eq.s32.totalorder %s9, 1
    %p60 = scmp.ne.s32.totalorder %s55, %s57
    %p61 = scmp.eq.s32.totalorder %s9, 0
    %p62 = por %p60, %p61
    %p63 = scmp.ne.s32.totalorder %s55, %s57
    %p64 = scmp.eq.s32.totalorder %s14, 1
    %p65 = por %p63, %p64
    %p66 = scmp.ne.s32.totalorder %s57, %s58
    %p67 = scmp.eq.s32.totalorder %s14, 0
    %p68 = por %p66, %p67
    %p69 = scmp.ne.s32.totalorder %s57, %s58
    %p70 = scmp.eq.s32.totalorder %s15, 1
    %p71 = por %p69, %p70
    %p73 = scmp.ne.s32.totalorder %s58, %s72
    %p74 = scmp.eq.s32.totalorder %s15, 0
    %p75 = por %p73, %p74
    %s77 = sadd.s32 %s76, 1
    %p80 = scmp.eq.s32.totalorder %s9, 1
    %p81 = scmp.ne.s32.totalorder %s76, %s78
    %p82 = scmp.eq.s32.totalorder %s9, 0
    %p83 = por %p81, %p82
    %p84 = scmp.ne.s32.totalorder %s76, %s78
    %p85 = scmp.eq.s32.totalorder %s14, 1
    %p86 = por %p84, %p85
    %p87 = scmp.ne.s32.totalorder %s78, %s79
    %p88 = scmp.eq.s32.totalorder %s14, 0
    %p89 = por %p87, %p88
    %p90 = scmp.ne.s32.totalorder %s78, %s79
    %p91 = scmp.eq.s32.totalorder %s15, 1
    %p92 = por %p90, %p91
    %p94 = scmp.ne.s32.totalorder %s79, %s93
    %p95 = scmp.eq.s32.totalorder %s15, 0
    %p96 = por %p94, %p95
    %s97 = ssub.s32 %s16, %s28
    %s98 = ssub.s32 %s17, %s24
    %s99 = sor.u32 %s97, %s98
    %p100 = scmp.eq.s32.totalorder %s99, 0
    %s102 = sadd.s32 %s101, 1
    %s103 = scalar_select %p100, %s101, %s102
    %p106 = pneg %p100
    %p107 = scmp.eq.s32.totalorder %s9, 1
    %p108 = por %p106, %p107
    %p109 = scmp.ne.s32.totalorder %s101, %s104
    %p110 = scmp.eq.s32.totalorder %s9, 0
    %p111 = por %p109, %p110
    %p112 = scmp.ne.s32.totalorder %s101, %s104
    %p113 = scmp.eq.s32.totalorder %s14, 1
    %p114 = por %p112, %p113
    %p115 = scmp.ne.s32.totalorder %s104, %s105
    %p116 = scmp.eq.s32.totalorder %s14, 0
    %p117 = por %p115, %p116
    %p118 = scmp.ne.s32.totalorder %s104, %s105
    %p119 = scmp.eq.s32.totalorder %s15, 1
    %p120 = por %p118, %p119
    %p122 = scmp.ne.s32.totalorder %s105, %s121
    %p123 = scmp.eq.s32.totalorder %s15, 0
    %p124 = por %p122, %p123
    %p125 = scmp.le.s32.totalorder 1, %s9
    %p126 = scmp.lt.s32.totalorder %s9, 3
    %p127 = pnand %p125, %p126
    %p128 = pneg %p127
    // Predicated region
    $region9: #{tpu_custom_call.1} parent=5 // pred_check
      _
    $region10: #{tpu_custom_call.1} parent=5 // pred_check_branch
      %130 = sbr.rel (%p127) target = $region12
    $region11: #{tpu_custom_call.1} parent=5 // pred_region
      %s131 = ssub.s32 %s9, 1
      // Predicated region
      $region13: #{tpu_custom_call.1} parent=11 // pred_check
        %p132 = pneg %p68
      $region14: #{tpu_custom_call.1} parent=11 // pred_check_branch
        %134 = sbr.rel (%p132) target = $region16
      $region15: #{tpu_custom_call.1} parent=11 // pred_region
        _
      $region16: #{tpu_custom_call.1} parent=11 // pred_fallthru
        _
      // Predicated region
      $region17: #{tpu_custom_call.1} parent=11 // pred_check
        %p135 = pneg %p89
      $region18: #{tpu_custom_call.1} parent=11 // pred_check_branch
        %137 = sbr.rel (%p135) target = $region20
      $region19: #{tpu_custom_call.1} parent=11 // pred_region
        _
      $region20: #{tpu_custom_call.1} parent=11 // pred_fallthru
        _
    $region12: #{tpu_custom_call.1} parent=5 // pred_fallthru
      _
    %p138 = scmp.lt.s32.totalorder %s9, 2
    // Predicated region
    $region21: #{tpu_custom_call.1} parent=5 // pred_check
      %p139 = pneg %p138
    $region22: #{tpu_custom_call.1} parent=5 // pred_check_branch
      %141 = sbr.rel (%p139) target = $region24
    $region23: #{tpu_custom_call.1} parent=5 // pred_region
      // Predicated region
      $region25: #{tpu_custom_call.1} parent=23 // pred_check
        %p142 = pneg %p41
      $region26: #{tpu_custom_call.1} parent=23 // pred_check_branch
        %144 = sbr.rel (%p142) target = $region28
      $region27: #{tpu_custom_call.1} parent=23 // pred_region
        %p145 = scmp.lt.s32.totalorder %s16, 1
        %s146 = scalar_select %p145, %s16, 1
        %s147 = smul.addr %s146, 2
        %s148 = smul.addr %s147, 4
        %s149 = scalar_lea.vmem %s0, %s148
      $region28: #{tpu_custom_call.1} parent=23 // pred_fallthru
        _
    $region24: #{tpu_custom_call.1} parent=5 // pred_fallthru
      _
    %p150 = scmp.le.s32.totalorder 1, %s9
    %p151 = scmp.lt.s32.totalorder %s9, 3
    %p152 = pnand %p150, %p151
    %p153 = pneg %p152
    // Predicated region
    $region29: #{tpu_custom_call.1} parent=5 // pred_check
      _
    $region30: #{tpu_custom_call.1} parent=5 // pred_check_branch
      %155 = sbr.rel (%p152) target = $region32
    $region31: #{tpu_custom_call.1} parent=5 // pred_region
      %s156 = ssub.s32 %s9, 1
      %p157 = scmp.lt.s32.totalorder %s18, 1
      %s158 = scalar_select %p157, %s18, 1
      %s159 = smul.addr %s158, 2
      %s160 = smul.addr %s159, 4
      %s161 = scalar_lea.vmem %s0, %s160
      %p162 = pneg %p47
      %p163 = pneg %p44
      %p164 = pneg %p68
      %p165 = pneg %p65
      %p166 = pneg %p89
      %p167 = pneg %p86
      %p168 = pneg %p117
      %p169 = pneg %p114
      %p170 = scmp.lt.s32.totalorder %s18, 1
      %s171 = scalar_select %p170, %s18, 1
      %p172 = scmp.lt.s32.totalorder %s19, 0
      %s173 = scalar_select %p172, %s19, 0
      %s174 = sadd.s32 %s173, %s171
      %s175 = smul.addr %s174, 8
      %s176 = scalar_lea.vmem %s3, %s175
      %p177 = scmp.lt.s32.totalorder %s18, 1
      %s178 = scalar_select %p177, %s18, 1
      %s179 = smul.addr %s178, 2
      %s180 = smul.addr %s179, 4
      %s181 = scalar_lea.vmem %s0, %s180
      %p182 = scmp.lt.s32.totalorder %s18, 1
      %s183 = scalar_select %p182, %s18, 1
      %p184 = scmp.lt.s32.totalorder %s19, 0
      %s185 = scalar_select %p184, %s19, 0
      %s186 = sadd.s32 %s185, %s183
      %s187 = smul.addr %s186, 8
      %s188 = scalar_lea.vmem %s3, %s187
      %s190 = smul.u32 %s19, 8
      %s191 = sshra.s32 %s190, 3
      %s192 = sand.u32 %s190, 7
      %s193 = smul.addr %s191, 4
      %s194 = scalar_lea.vmem %s181, %s193
      %v195 = vld [vmem:[%s194] sm:$0xf]
      %v196 = vld [vmem:[%s194 + $0x4] sm:$0xf]
      %v197 = vld [vmem:[%s1] sm:$0xf]
      %v198 = vld [vmem:[%s1 + $0x4] sm:$0xf]
      %v199 = vld [vmem:[%s1 + $0x8] sm:$0xf]
      %v200 = vld [vmem:[%s1 + $0xc] sm:$0xf]
      %v203 = vunpack.c.l.b16 %v195
      %v204 = vunpack.c.l.b16 %v196
      %v205 = vpack.c.b16 %v204, %v203
      %v210 = vunpack.c.l.b16 %v197
      %v211 = vunpack.c.l.b16 %v198
      %v212 = vunpack.c.l.b16 %v199
      %v213 = vunpack.c.l.b16 %v200
      %v214 = vpack.c.b16 %v211, %v210
      %v215 = vpack.c.b16 %v213, %v212
      %vm218 = vcmask 261120
      %v220 = vsel %vm218, %v205, 0
      %222 = vmatprep.subr.bf16.mxu0 0
      %223 = vmatpush1.bf16.msra.mxu0 0
      %224 = vmatprep.subr.bf16.mxu0 0
      %225 = vmatpush1.bf16.msra.mxu0 0
      %226 = vmatprep.subr.bf16.mxu0 0
      %227 = vmatpush1.bf16.msra.mxu0 0
      %228 = vmatprep.subr.bf16.mxu0 0
      %229 = vmatpush1.bf16.msra.mxu0 0
      %230 = vmatprep.subr.bf16.mxu0 0
      %231 = vmatpush1.bf16.msra.mxu0 0
      %232 = vmatprep.subr.bf16.mxu0 0
      %233 = vmatpush1.bf16.msra.mxu0 0
      %234 = vmatprep.subr.bf16.mxu0 0
      %235 = vmatpush1.bf16.msra.mxu0 %v215
      %236 = vmatprep.subr.bf16.mxu0 0
      %237 = vmatpush1.bf16.msra.mxu0 %v214
      %238 = vmatprep.subr.bf16.mxu0 0
      %239 = vmatpush2.bf16.msra.mxu0 0
      %240 = vmatprep.subr.bf16.mxu0 0
      %241 = vmatpush2.bf16.msra.mxu0 0
      %242 = vmatprep.subr.bf16.mxu0 0
      %243 = vmatpush2.bf16.msra.mxu0 0
      %244 = vmatprep.subr.bf16.mxu0 0
      %245 = vmatpush2.bf16.msra.mxu0 0
      %246 = vmatprep.subr.bf16.mxu0 0
      %247 = vmatpush2.bf16.msra.mxu0 0
      %248 = vmatprep.subr.bf16.mxu0 0
      %249 = vmatpush2.bf16.msra.mxu0 0
      %250 = vmatprep.subr.bf16.mxu0 0
      %251 = vmatpush2.bf16.msra.mxu0 0
      %252 = vmatprep.subr.bf16.mxu0 0
      %253 = vmatpush2.bf16.msra.mxu0 0
      %254 = vmatprep.mubr.bf16.mxu0 0
      %255 = vmatmul.mubr.bf16.gmra.mxu0 %v220
      %v256 = vpop.f32.mrf.mxu0
      %v257 = vadd.f32 0.0, %v256
      %v258 = vpop.f32.mrf.mxu0
      %v259 = vpop.f32.mrf.mxu0
      %v260 = vadd.f32 0.0, %v259
      %v261 = vpop.f32.mrf.mxu0
      %262 = vdwg.mxu0
      %v263 = vld [vmem:[%s2] sm:$0x1]
      %v265 = vlaneseq
      %v266 = vshrl.u32 %v265, 7
      %v267 = vsub.s32 0, %v266
      %v268 = vrot.slane %v263, %v267
      %v270 = vadd.f32 %v268, %v257
      %vm273 = vcmask 1046528
      %v274 = vrot.slane %v257, 1
      %v275 = vrot.slane %v260, 1
      %v276 = vsel %vm273, %v274, %v275
      %277 = vrot.lane.b32.xlu0 %v276, 124
      %v278 = vpop.permute.xlu0 %277
      %v280 = vadd.f32 %v270, %v278
      %vm281 = vcmask 1045504
      %v282 = vrot.slane %v257, 2
      %v283 = vrot.slane %v260, 2
      %v284 = vsel %vm281, %v282, %v283
      %285 = vrot.lane.b32.xlu0 %v284, 120
      %v286 = vpop.permute.xlu0 %285
      %v288 = vadd.f32 %v280, %v286
      %vm289 = vcmask 1044480
      %v290 = vrot.slane %v257, 3
      %v291 = vrot.slane %v260, 3
      %v292 = vsel %vm289, %v290, %v291
      %293 = vrot.lane.b32.xlu0 %v292, 116
      %v294 = vpop.permute.xlu0 %293
      %v296 = vadd.f32 %v288, %v294
      %vm297 = vcmask 1043456
      %v298 = vrot.slane %v257, 4
      %v299 = vrot.slane %v260, 4
      %v300 = vsel %vm297, %v298, %v299
      %301 = vrot.lane.b32.xlu0 %v300, 112
      %v302 = vpop.permute.xlu0 %301
      %v304 = vadd.f32 %v296, %v302
      %vm305 = vcmask 31744
      %306 = vst.msk [vmem:[%s188] sm:$0xff] %vm305, %v304
      %p307 = scmp.lt.s32.totalorder %s18, 1
      %s308 = scalar_select %p307, %s18, 1
      %p309 = scmp.lt.s32.totalorder %s19, 0
      %s310 = scalar_select %p309, %s19, 0
      %s311 = sadd.s32 %s310, %s308
      %s312 = smul.addr %s311, 8
      %s313 = scalar_lea.vmem %s3, %s312
      // Predicated region
      $region33: #{tpu_custom_call.1} parent=31 // pred_check
        %p314 = pneg %p114
      $region34: #{tpu_custom_call.1} parent=31 // pred_check_branch
        %316 = sbr.rel (%p314) target = $region36
      $region35: #{tpu_custom_call.1} parent=31 // pred_region
        _
      $region36: #{tpu_custom_call.1} parent=31 // pred_fallthru
        _
    $region32: #{tpu_custom_call.1} parent=5 // pred_fallthru
      _
    %p317 = scmp.le.s32.totalorder 2, %s9
    // Predicated region
    $region37: #{tpu_custom_call.1} parent=5 // pred_check
      %p318 = pneg %p317
    $region38: #{tpu_custom_call.1} parent=5 // pred_check_branch
      %320 = sbr.rel (%p318) target = $region40
    $region39: #{tpu_custom_call.1} parent=5 // pred_region
      %s321 = ssub.s32 %s9, 2
      // Predicated region
      $region41: #{tpu_custom_call.1} parent=39 // pred_check
        %p322 = pneg %p120
      $region42: #{tpu_custom_call.1} parent=39 // pred_check_branch
        %324 = sbr.rel (%p322) target = $region44
      $region43: #{tpu_custom_call.1} parent=39 // pred_region
        %p325 = scmp.lt.s32.totalorder %s20, 1
        %s326 = scalar_select %p325, %s20, 1
        %p327 = scmp.lt.s32.totalorder %s21, 0
        %s328 = scalar_select %p327, %s21, 0
        %s329 = sadd.s32 %s328, %s326
        %s330 = smul.addr %s329, 8
        %s331 = scalar_lea.vmem %s3, %s330
      $region44: #{tpu_custom_call.1} parent=39 // pred_fallthru
        _
    $region40: #{tpu_custom_call.1} parent=5 // pred_fallthru
      _
  $region6: #{tpu_custom_call.1} parent=0 // loop_footer
    %s13 = sadd.s32 1, %s9
  $region7: #{tpu_custom_call.1} parent=0 // loop_footer_branch
    %8 = sbr.rel target = $region3
  $region8: #{tpu_custom_call.1} parent=0 // loop_exit
    _

</llo_original>
